<compile_context>
chip_gen: v7x
topology: tpu7x:2x2x1
jax: 0.10.0
libtpu: 0.0.40
codegen_flags: <defaults>
</compile_context>

<pallas_src>
import functools
import math

import jax
import jax.numpy as jnp
from jax import lax
from jax.experimental import pallas as pl
from jax.experimental.pallas import tpu as pltpu


def _round_up(v, m):
    return ((v + m - 1) // m) * m


def _xlogx(v):
    # xlogy(v, v) with the 0*log(0) == 0 convention, evaluated on the host.
    return 0.0 if v <= 0.0 else float(v) * math.log(float(v))


def _choose_tile_rows(n_rows, m_pad, itemsize, sublane):
    # Keep one input buffer <= ~12 MiB so the double-buffered pipeline fits
    # comfortably inside v7x's 64 MiB physical VMEM (and the 48 MiB scoped limit).
    per_buffer_budget = 12 * 1024 * 1024
    max_rows = max(sublane, per_buffer_budget // (m_pad * itemsize))
    tile = min(1024, max_rows, max(n_rows, sublane))
    tile = max(sublane, (tile // sublane) * sublane)
    return tile


def _label_smoothing_kernel(x_ref, tgt_ref, out_ref, *,
                            smooth_val, confidence, t_row_sum, num_classes):
    x = x_ref[...].astype(jnp.float32)            # (TILE_N, M_pad)
    tn, m_pad = x.shape
    tgt = tgt_ref[...]                            # (TILE_N, 1) int32; -1 => padded row

    col_ids = lax.broadcasted_iota(jnp.int32, (tn, m_pad), 1)

    # log-softmax pieces. Padded class lanes hold f32-min: max ignores them and
    # exp underflows to exactly 0, so lse is unaffected.
    row_max = jnp.max(x, axis=1, keepdims=True)
    z = x - row_max
    lse = jnp.log(jnp.sum(jnp.exp(z), axis=1, keepdims=True))    # (TILE_N, 1)

    if m_pad == num_classes:                      # static (trace-time) branch
        sum_z = jnp.sum(z, axis=1, keepdims=True)
    else:
        sum_z = jnp.sum(jnp.where(col_ids < num_classes, z, 0.0),
                        axis=1, keepdims=True)
    z_tgt = jnp.sum(jnp.where(col_ids == tgt, z, 0.0), axis=1, keepdims=True)

    # per-row  sum_m true_dist * logp   (true_dist never materialized)
    cross = (smooth_val * sum_z
             + (confidence - smooth_val) * z_tgt
             - t_row_sum * lse)
    cross = jnp.where(tgt >= 0, cross, 0.0)       # drop padded rows
    partial = jnp.sum(cross)

    # Lane-dense unmasked store of this tile's partial sum.
    out_ref[...] = jnp.broadcast_to(partial, (1, 8, 128)).astype(jnp.float32)


def label_smoothing_loss(x, target, *, size, smoothing=0.0, tile_rows=None):
    """x: (N, M) float logits, target: (N,) int class ids. Returns scalar f32 loss."""
    n, m = x.shape
    assert m == size, "x.shape[1] must equal `size`"
    smoothing = float(smoothing)
    confidence = 1.0 - smoothing
    smooth_val = smoothing / (size - 1) if size > 1 else 0.0
    t_row_sum = confidence + (size - 1) * smooth_val          # == 1.0 analytically

    itemsize = jnp.dtype(x.dtype).itemsize
    sublane = 16 if itemsize == 2 else 8
    m_pad = _round_up(m, 128)
    if tile_rows is None:
        tile_n = _choose_tile_rows(n, m_pad, itemsize, sublane)
    else:
        tile_n = max(sublane, _round_up(int(tile_rows), sublane))
    n_pad = _round_up(max(n, 1), tile_n)
    num_tiles = n_pad // tile_n

    # Pad classes to 128-lane multiple (f32-min so exp underflows to 0) and rows to
    # the tile size (zeros + target=-1, masked out inside the kernel).
    neg = float(jnp.finfo(x.dtype).min)
    x_pad = jnp.full((n_pad, m_pad), neg, dtype=x.dtype)
    x_pad = x_pad.at[:n, :m].set(x)
    if n_pad > n:
        x_pad = x_pad.at[n:, :].set(jnp.zeros((n_pad - n, m_pad), x.dtype))
    tgt_pad = jnp.full((n_pad, 1), -1, dtype=jnp.int32)
    tgt_pad = tgt_pad.at[:n, 0].set(target.astype(jnp.int32))

    kernel = functools.partial(_label_smoothing_kernel,
                               smooth_val=smooth_val,
                               confidence=confidence,
                               t_row_sum=t_row_sum,
                               num_classes=int(size))

    partials = pl.pallas_call(
        kernel,
        out_shape=jax.ShapeDtypeStruct((num_tiles, 8, 128), jnp.float32),
        grid_spec=pltpu.PrefetchScalarGridSpec(
            num_scalar_prefetch=0,
            grid=(num_tiles,),
            in_specs=[
                pl.BlockSpec((tile_n, m_pad), lambda i: (i, 0)),   # logits tile
                pl.BlockSpec((tile_n, 1), lambda i: (i, 0)),       # targets tile
            ],
            out_specs=pl.BlockSpec((1, 8, 128), lambda i: (i, 0, 0)),
        ),
        compiler_params=pltpu.CompilerParams(
            dimension_semantics=("parallel",),
            vmem_limit_bytes=48 * 1024 * 1024,
        ),
        cost_estimate=pl.CostEstimate(
            flops=int(8 * n_pad * m_pad),
            transcendentals=int(n_pad * m_pad + n_pad),
            bytes_accessed=int(n_pad * m_pad * itemsize + n_pad * 4
                               + num_tiles * 8 * 128 * 4),
        ),
    )(x_pad, tgt_pad)

    cross_total = jnp.sum(partials[:, 0, 0])                      # sum true_dist*logp
    t_log_t_total = n * (_xlogx(confidence) + (size - 1) * _xlogx(smooth_val))
    return jnp.float32(t_log_t_total) - cross_total


def _reference(x, target, size, smoothing):
    logp = jax.nn.log_softmax(x.astype(jnp.float32), axis=1)
    conf = 1.0 - smoothing
    smooth_val = smoothing / (size - 1) if size > 1 else 0.0
    onehot = jax.nn.one_hot(target, size, dtype=jnp.float32)
    true_dist = onehot * conf + (1.0 - onehot) * smooth_val
    t_log_t = jnp.where(true_dist > 0,
                        true_dist * jnp.log(jnp.maximum(true_dist, 1e-30)), 0.0)
    return jnp.sum(t_log_t - true_dist * logp)


if __name__ == "__main__":
    key = jax.random.PRNGKey(0)

    cases = [
        # (N, M, smoothing, tile_rows)
        (8, 32, 0.1, None),    # small demo shape (N samples, M classes)
        (5, 200, 0.0, None),   # row + class padding, smoothing=0 (pure NLL path)
        (24, 160, 0.2, 8),     # multi-tile grid (3 row tiles) + class padding
    ]

    for (N, M, smoothing, tile_rows) in cases:
        key, kx, kt = jax.random.split(key, 3)
        x = jax.random.normal(kx, (N, M), dtype=jnp.float32)
        target = jax.random.randint(kt, (N,), 0, M, dtype=jnp.int32)

        loss = jax.block_until_ready(
            label_smoothing_loss(x, target, size=M, smoothing=smoothing,
                                 tile_rows=tile_rows))
        ref = jax.block_until_ready(_reference(x, target, M, smoothing))

        assert jnp.isfinite(loss), f"non-finite loss for case {(N, M, smoothing)}"
        assert jnp.allclose(loss, ref, rtol=2e-5, atol=1e-4), \
            ((N, M, smoothing), float(loss), float(ref))

    print("KERNEL_OK")
</pallas_src>

<mosaic_0001>
module attributes {stable_mosaic.version = 11 : i64} {
  func.func @_label_smoothing_kernel(%arg0: i32, %arg1: memref<8x128xf32, #tpu.memory_space<vmem>>, %arg2: memref<8x1xi32, #tpu.memory_space<vmem>>, %arg3: memref<1x8x128xf32, #tpu.memory_space<vmem>>) attributes {dimension_semantics = [#tpu.dimension_semantics<parallel>], iteration_bounds = array<i64: 1>, scalar_prefetch = 0 : i64, scratch_operands = 0 : i64, tpu.core_type = #tpu.core_type<tc>, window_params = [{transform_indices = @transform_0, window_bounds = array<i64: 8, 128>}, {transform_indices = @transform_1, window_bounds = array<i64: 8, 1>}, {transform_indices = @transform_2, window_bounds = array<i64: 1, 8, 128>}]} {
    %c0 = arith.constant 0 : index
    %c0_0 = arith.constant 0 : index
    %0 = vector.load %arg1[%c0, %c0_0] : memref<8x128xf32, #tpu.memory_space<vmem>>, vector<8x128xf32>
    %c0_1 = arith.constant 0 : index
    %c0_2 = arith.constant 0 : index
    %1 = vector.load %arg2[%c0_1, %c0_2] : memref<8x1xi32, #tpu.memory_space<vmem>>, vector<8x1xi32>
    %2 = tpu.iota {dimensions = array<i32: 1>} : vector<8x128xi32>
    %cst = arith.constant dense<0xFF800000> : vector<8xf32>
    %3 = vector.multi_reduction <maximumf>, %0, %cst [1] : vector<8x128xf32> to vector<8xf32>
    %4 = vector.shape_cast %3 : vector<8xf32> to vector<8x1xf32>
    %5 = vector.broadcast %4 : vector<8x1xf32> to vector<8x128xf32>
    %6 = arith.subf %0, %5 : vector<8x128xf32>
    %7 = math.exp %6 : vector<8x128xf32>
    %cst_3 = arith.constant dense<0.000000e+00> : vector<8xf32>
    %8 = vector.multi_reduction <add>, %7, %cst_3 [1] : vector<8x128xf32> to vector<8xf32>
    %9 = vector.shape_cast %8 : vector<8xf32> to vector<8x1xf32>
    %10 = math.log %9 : vector<8x1xf32>
    %c32_i32 = arith.constant 32 : i32
    %11 = vector.broadcast %c32_i32 : i32 to vector<8x128xi32>
    %12 = arith.cmpi slt, %2, %11 : vector<8x128xi32>
    %cst_4 = arith.constant 0.000000e+00 : f32
    %13 = vector.broadcast %cst_4 : f32 to vector<8x128xf32>
    %14 = arith.select %12, %6, %13 : vector<8x128xi1>, vector<8x128xf32>
    %cst_5 = arith.constant dense<0.000000e+00> : vector<8xf32>
    %15 = vector.multi_reduction <add>, %14, %cst_5 [1] : vector<8x128xf32> to vector<8xf32>
    %16 = vector.shape_cast %15 : vector<8xf32> to vector<8x1xf32>
    %17 = vector.broadcast %1 : vector<8x1xi32> to vector<8x128xi32>
    %18 = arith.cmpi eq, %2, %17 : vector<8x128xi32>
    %cst_6 = arith.constant 0.000000e+00 : f32
    %19 = vector.broadcast %cst_6 : f32 to vector<8x128xf32>
    %20 = arith.select %18, %6, %19 : vector<8x128xi1>, vector<8x128xf32>
    %cst_7 = arith.constant dense<0.000000e+00> : vector<8xf32>
    %21 = vector.multi_reduction <add>, %20, %cst_7 [1] : vector<8x128xf32> to vector<8xf32>
    %22 = vector.shape_cast %21 : vector<8xf32> to vector<8x1xf32>
    %cst_8 = arith.constant 0.0032258064 : f32
    %23 = vector.broadcast %cst_8 : f32 to vector<8x1xf32>
    %24 = arith.mulf %23, %16 : vector<8x1xf32>
    %cst_9 = arith.constant 0.896774172 : f32
    %25 = vector.broadcast %cst_9 : f32 to vector<8x1xf32>
    %26 = arith.mulf %25, %22 : vector<8x1xf32>
    %27 = arith.addf %24, %26 : vector<8x1xf32>
    %cst_10 = arith.constant 1.000000e+00 : f32
    %28 = vector.broadcast %cst_10 : f32 to vector<8x1xf32>
    %29 = arith.mulf %28, %10 : vector<8x1xf32>
    %30 = arith.subf %27, %29 : vector<8x1xf32>
    %c0_i32 = arith.constant 0 : i32
    %31 = vector.broadcast %c0_i32 : i32 to vector<8x1xi32>
    %32 = arith.cmpi sge, %1, %31 : vector<8x1xi32>
    %cst_11 = arith.constant 0.000000e+00 : f32
    %33 = vector.broadcast %cst_11 : f32 to vector<8x1xf32>
    %34 = arith.select %32, %30, %33 : vector<8x1xi1>, vector<8x1xf32>
    %35 = vector.shape_cast %34 : vector<8x1xf32> to vector<1x8x1xf32>
    %cst_12 = arith.constant dense<0.000000e+00> : vector<1xf32>
    %36 = vector.multi_reduction <add>, %35, %cst_12 [1, 2] : vector<1x8x1xf32> to vector<1xf32>
    %37 = vector.shape_cast %36 : vector<1xf32> to vector<1x1x1xf32>
    %38 = vector.extract %37[0, 0, 0] : f32 from vector<1x1x1xf32>
    %39 = vector.broadcast %38 : f32 to vector<1x8x128xf32>
    %c0_13 = arith.constant 0 : index
    %c0_14 = arith.constant 0 : index
    %c0_15 = arith.constant 0 : index
    %40 = vector.load %arg3[%c0_13, %c0_14, %c0_15] : memref<1x8x128xf32, #tpu.memory_space<vmem>>, vector<1x8x128xf32>
    tpu.vector_store %arg3[%c0_13, %c0_14, %c0_15], %39 {strides = array<i32>} : memref<1x8x128xf32, #tpu.memory_space<vmem>>, vector<1x8x128xf32>,
    return
  }
  func.func @transform_0(%arg0: i32) -> (i32, i32) {
    %c0_i32 = arith.constant 0 : i32
    %c0_i32_0 = arith.constant 0 : i32
    return %arg0, %c0_i32 : i32, i32
  }
  func.func @transform_1(%arg0: i32) -> (i32, i32) {
    %c0_i32 = arith.constant 0 : i32
    %c0_i32_0 = arith.constant 0 : i32
    return %arg0, %c0_i32 : i32, i32
  }
  func.func @transform_2(%arg0: i32) -> (i32, i32, i32) {
    %c0_i32 = arith.constant 0 : i32
    %c0_i32_0 = arith.constant 0 : i32
    %c0_i32_1 = arith.constant 0 : i32
    return %arg0, %c0_i32, %c0_i32_0 : i32, i32, i32
  }
}

</mosaic_0001>

<llo_original>
// kernel: tpu_custom_call.1
$region0: #{tpu_custom_call.1}
  #allocation0 [shape = 'u32[]', space=smem, size = 0x4, offset = 0x4, fixed_abs, tag = 'smem constant byte address 0x4 - core index']
  #allocation1 [shape = 'u32[144,128]{1,0:T(1,128)}', space=vmem, size = 0x12000, scoped, tag = 'internal scratch']
  %s0 = inlined_call_operand.vmem [shape: f32[8,128], index: 0, kind: input, shape index: {}]
  %s1 = inlined_call_operand.vmem [shape: s32[8,1], index: 1, kind: input, shape index: {}]
  %s2 = inlined_call_operand.hbm [shape: f32[1,8,128], index: 2, kind: output, shape index: {}]
  %s3 = sld [smem:[#allocation0]]
  $region18: #{tpu_custom_call.1} parent=0
    _
  %s5 = ssub.s32 1, %s3
  %s6 = scalar_select 0, %s5, %s3
  $region1: #{tpu_custom_call.1} parent=0
    #allocation2 [shape = 'u8[4096]{0}', space=vmem, size = 0x1000, scoped, tag = 'output window, operand 0, single buffered']
    #allocation3 [shape = 's32[1]{0}', space=sflag, size = 0x4, scoped, tag = 'scoped memory for tpu_custom_call.1']
    %7 = vsyncpa [#allocation3], 0
    // Predicated region
    $region2: #{tpu_custom_call.1} parent=1 // pred_check
      _
    $region3: #{tpu_custom_call.1} parent=1 // pred_check_branch
      %9 = sbr.rel (0) target = $region5
    $region4: #{tpu_custom_call.1} parent=1 // pred_region
      _
    $region5: #{tpu_custom_call.1} parent=1 // pred_fallthru
      _
    // Predicated region
    $region6: #{tpu_custom_call.1} parent=1 // pred_check
      _
    $region7: #{tpu_custom_call.1} parent=1 // pred_check_branch
      %11 = sbr.rel (0) target = $region9
    $region8: #{tpu_custom_call.1} parent=1 // pred_region
      _
    $region9: #{tpu_custom_call.1} parent=1 // pred_fallthru
      _
    %v12 = vld [vmem:[%s0] sm:$0xff]
    %v13 = vld [vmem:[%s1] sm:$0xff]
    %v14 = vlaneseq
    %v15 = vand.u32 %v14, 127
    %16 = vmax.xlane.f32.xlu0 %v12
    %v17 = vpop.xlane.xlu0 %16
    %v18 = vsub.f32 %v12, %v17
    %v19 = vmul.f32 %v18, 1.442695
    %v20 = vpow.pop %v19
    %21 = vadd.xlane.f32.xlu0 %v20
    %v22 = vpop.xlane.xlu0 %21
    %v23 = vlog2.pop %v22
    %v24 = vmul.f32 %v23, 0.6931472
    %vm25 = vcmp.lt.s32.totalorder %v15, 32
    %v26 = vsel %vm25, %v18, 0.0
    %27 = vadd.xlane.f32.xlu0 %v26
    %v28 = vpop.xlane.xlu0 %27
    %29 = vset.pattern.permute.xlu0 0
    %30 = vperm.xlu0 %29, %v13
    %v31 = vpop.permute.xlu0 %30
    %vm32 = vcmp.eq.s32.totalorder %v15, %v31
    %v33 = vsel %vm32, %v18, 0.0
    %34 = vadd.xlane.f32.xlu0 %v33
    %v35 = vpop.xlane.xlu0 %34
    %v36 = vmul.f32 %v28, 0.0032258064
    %v37 = vmul.f32 %v35, 0.8967742
    %v38 = vadd.f32 %v36, %v37
    %v39 = vsub.f32 %v38, %v24
    %vm40 = vcmp.ge.s32.totalorder %v13, 0
    %v41 = vsel %vm40, %v39, 0.0
    %vm42 = vcmask 7168
    %v43 = vsel %vm42, %v41, 0.0
    %44 = vadd.xlane.f32.xlu0 %v43
    %v45 = vpop.xlane.xlu0 %44
    %v46 = vrot.slane %v45, 4
    %v47 = vadd.f32 %v45, %v46
    %v48 = vrot.slane %v47, 2
    %v49 = vadd.f32 %v47, %v48
    %v50 = vrot.slane %v49, 1
    %v51 = vadd.f32 %v49, %v50
    %s52 = vtos %v51
    %v53 = vstv %s52
    %54 = vst [vmem:[#allocation2] sm:$0xff] %v53
    // Predicated region
    $region10: #{tpu_custom_call.1} parent=1 // pred_check
      _
    $region11: #{tpu_custom_call.1} parent=1 // pred_check_branch
      %56 = sbr.rel (0) target = $region13
    $region12: #{tpu_custom_call.1} parent=1 // pred_region
      %s58 = ssub.s32 128, 128
      %59 = vsyncadd [#allocation3], %s58
      %s61 = sshll.u32 [#allocation2], 4
      %s62 = int_to_ptr.vmem [resolvable:$true] %s61
      %64 = dma.vmem_to_hbm [thread:$0]  %s62, 128, %s2, [#allocation3]
    $region13: #{tpu_custom_call.1} parent=1 // pred_fallthru
      _
    // Predicated region
    $region14: #{tpu_custom_call.1} parent=1 // pred_check
      _
    $region15: #{tpu_custom_call.1} parent=1 // pred_check_branch
      %66 = sbr.rel (0) target = $region17
    $region16: #{tpu_custom_call.1} parent=1 // pred_region
      %67 = dma.done [#allocation3], 128
    $region17: #{tpu_custom_call.1} parent=1 // pred_fallthru
      _
    %68 = vsyncpa [#allocation3], 1

</llo_original>
